<compile_context>
chip_gen: v7x
topology: tpu7x:2x2x1
jax: 0.10.0
libtpu: 0.0.40
codegen_flags: <defaults>
</compile_context>

<pallas_src>
import functools
import math

import numpy as np
import jax
import jax.numpy as jnp
from jax.experimental import pallas as pl
from jax.experimental.pallas import tpu as pltpu

FREQ_INIT = "geometric"
FREQUENCY_NUM = 32
MAX_RADIUS = 10000.0
MIN_RADIUS = 10.0
COORD_DIM = 2
OUT_DIM = 6 * FREQUENCY_NUM  # 192


def _round_up(x, m):
    return ((x + m - 1) // m) * m


def _cdiv(a, b):
    return (a + b - 1) // b


def _build_projection_constants():
    """W/pi (2, 6F) and phase/pi bias (1, 6F) so the kernel computes sin(pi*t).

    Column index j = f*6 + d (matching the reference (B,N,F,6)->(B,N,6F)
    reshape).  Rows of W hold unit_vec{1,1,2,2,3,3}[d] * freq[f] / pi; the bias
    is 0 for even j (sin) and 0.5 for odd j (cos(x) == sin(x + pi/2), i.e.
    +0.5 in units of pi — exactly representable, so the cos path is free).
    """
    log_inc = math.log(float(MAX_RADIUS) / float(MIN_RADIUS)) / (FREQUENCY_NUM - 1.0)
    timescales = MIN_RADIUS * np.exp(
        np.arange(FREQUENCY_NUM, dtype=np.float64) * log_inc
    )
    freqs = 1.0 / timescales                                         # (F,)
    u1 = np.array([1.0, 0.0], dtype=np.float64)
    u2 = np.array([-0.5, math.sqrt(3.0) / 2.0], dtype=np.float64)
    u3 = np.array([-0.5, -math.sqrt(3.0) / 2.0], dtype=np.float64)
    u6 = np.stack([u1, u1, u2, u2, u3, u3], axis=1)                  # (2, 6)
    w = (u6[:, None, :] * freqs[None, :, None]).reshape(COORD_DIM, OUT_DIM)
    col = np.arange(OUT_DIM)
    bias = np.where(col % 2 == 0, 0.0, 0.5)[None, :]                 # (1, 6F)
    return (w / math.pi).astype(np.float32), bias.astype(np.float32)


_W_OVER_PI_NP, _BIAS_NP = _build_projection_constants()

# sin(pi*e) on e in [-1, 1] as an odd degree-15 Taylor polynomial.
# |error| <= pi^17/17! ~= 8e-7 plus a few f32 ulps from Horner.
_SINPI_C = (
    3.141592653589793,        # pi
    -5.16771278004997,        # -pi^3/3!
    2.5501640398773455,       # +pi^5/5!
    -0.5992645293207921,      # -pi^7/7!
    0.08214588661112823,      # +pi^9/9!
    -0.007370430945714351,    # -pi^11/11!
    4.6630280576761256e-04,   # +pi^13/13!
    -2.1915353447830216e-05,  # -pi^15/15!
)


def _sin_pi(t):
    """sin(pi * t): exact mod-2 reduction (f32) + odd polynomial on [-1, 1)."""
    m = jnp.floor(t * 0.5 + 0.5)
    e = t - (m + m)                      # e in [-1, 1); exact for our |t| range
    e2 = e * e
    q = _SINPI_C[7]
    q = q * e2 + _SINPI_C[6]
    q = q * e2 + _SINPI_C[5]
    q = q * e2 + _SINPI_C[4]
    q = q * e2 + _SINPI_C[3]
    q = q * e2 + _SINPI_C[2]
    q = q * e2 + _SINPI_C[1]
    return e * (_SINPI_C[0] + e2 * q)


def _grid_cell_kernel(coords_ref, w_ref, bias_ref, out_ref):
    # coords_ref: (tm, 2); w_ref: (2, 6F); bias_ref: (1, 6F); out_ref: (tm, 6F)
    x = coords_ref[:, 0:1]               # (tm, 1): lane-broadcast against (1, 6F)
    y = coords_ref[:, 1:2]
    wx = w_ref[0:1, :]                   # (1, 6F): sublane-broadcast
    wy = w_ref[1:2, :]
    t = x * wx + y * wy + bias_ref[...]  # phase / pi, pure f32 VPU math
    out_ref[...] = _sin_pi(t)


@functools.partial(jax.jit, static_argnames=("tile_m",))
def theory_grid_cell_encode(coords, tile_m=4096):
    """coords: (B, N, 2) float -> (B, N, 6*frequency_num) float32 embeddings."""
    assert tile_m % 8 == 0, "tile_m must be sublane-aligned (multiple of 8)"
    B, N, C = coords.shape
    assert C == COORD_DIM
    M = B * N
    coords_2d = coords.astype(jnp.float32).reshape(M, COORD_DIM)

    # Whole array for tiny inputs; otherwise a sublane-aligned tile capped at
    # tile_m, targeting >=2 (ideally ~4) grid steps so the "parallel" axis can
    # split across v7x's two TensorCores.  No explicit padding / slicing: the
    # ragged final block (both input rows and output rows) is masked by Pallas.
    if M <= 128:
        tm = M
    else:
        tm = min(tile_m, max(128, _round_up(_cdiv(M, 4), 8)))
    grid_m = _cdiv(M, tm)

    w = jnp.asarray(_W_OVER_PI_NP)       # (2, 192) pallas_call input (not captured)
    bias = jnp.asarray(_BIAS_NP)         # (1, 192)

    # VMEM per step at tm=4096: in 2x(tm*128*4) ~ 4 MiB (lane-padded), out
    # 2x(tm*192*4) ~ 6.3 MiB, a few (tm,192) f32 temporaries ~ 10 MiB: ~20 MiB.
    out = pl.pallas_call(
        _grid_cell_kernel,
        out_shape=jax.ShapeDtypeStruct((M, OUT_DIM), jnp.float32),
        grid=(grid_m,),
        in_specs=[
            pl.BlockSpec((tm, COORD_DIM), lambda i: (i, 0)),
            pl.BlockSpec((COORD_DIM, OUT_DIM), lambda i: (0, 0)),
            pl.BlockSpec((1, OUT_DIM), lambda i: (0, 0)),
        ],
        out_specs=pl.BlockSpec((tm, OUT_DIM), lambda i: (i, 0)),
        compiler_params=pltpu.CompilerParams(
            dimension_semantics=("parallel",),
            vmem_limit_bytes=48 * 1024 * 1024,
        ),
    )(coords_2d, w, bias)

    return out.reshape(B, N, OUT_DIM)


# TODO(synk): self.ffn (MultiLayerFeedForwardNN) is constructed by the module
# but never applied in forward(), so it is intentionally not implemented here.


def _reference_np(coords):
    """Faithful numpy float64 port of make_input_embeds (the PyTorch forward)."""
    coords = np.asarray(coords, dtype=np.float64)
    B, N, _ = coords.shape
    log_inc = math.log(float(MAX_RADIUS) / float(MIN_RADIUS)) / (FREQUENCY_NUM - 1.0)
    timescales = MIN_RADIUS * np.exp(np.arange(FREQUENCY_NUM).astype(float) * log_inc)
    freq_list = 1.0 / timescales
    freq_mat = np.repeat(np.expand_dims(freq_list, axis=1), 6, axis=1)   # (F, 6)
    u1 = np.array([1.0, 0.0])
    u2 = np.array([-0.5, math.sqrt(3.0) / 2.0])
    u3 = np.array([-0.5, -math.sqrt(3.0) / 2.0])
    a1 = np.expand_dims(coords @ u1, -1)
    a2 = np.expand_dims(coords @ u2, -1)
    a3 = np.expand_dims(coords @ u3, -1)
    angle = np.concatenate([a1, a1, a2, a2, a3, a3], axis=-1)            # (B, N, 6)
    angle = np.repeat(np.expand_dims(angle, axis=-2), FREQUENCY_NUM, axis=-2)
    angle = angle * freq_mat
    spr = angle.reshape(B, N, -1)
    spr[:, :, 0::2] = np.sin(spr[:, :, 0::2])
    spr[:, :, 1::2] = np.cos(spr[:, :, 1::2])
    return spr.astype(np.float32)


if __name__ == "__main__":
    key = jax.random.PRNGKey(0)
    k1, k2 = jax.random.split(key)

    # Small shape consistent with the module input (batch, num_context_pt, 2).
    coords = jax.random.uniform(
        k1, (2, 8, COORD_DIM), dtype=jnp.float32, minval=-5000.0, maxval=5000.0
    )
    out = jax.block_until_ready(theory_grid_cell_encode(coords))
    assert out.shape == (2, 8, OUT_DIM), out.shape
    ref = _reference_np(np.asarray(coords))
    err = float(np.max(np.abs(np.asarray(out, dtype=np.float32) - ref)))
    assert err < 1e-3, f"max abs err {err}"

    # Ragged / multi-step grid path (M=210 with 128-row tiles): exercises the
    # masked final block and a >1-step "parallel" grid.
    coords2 = jax.random.uniform(
        k2, (3, 70, COORD_DIM), dtype=jnp.float32, minval=-5000.0, maxval=5000.0
    )
    out2 = jax.block_until_ready(theory_grid_cell_encode(coords2, tile_m=128))
    ref2 = _reference_np(np.asarray(coords2))
    assert np.all(np.isfinite(np.asarray(out2)))
    err2 = float(np.max(np.abs(np.asarray(out2, dtype=np.float32) - ref2)))
    assert err2 < 1e-3, f"max abs err (ragged) {err2}"

    print("KERNEL_OK")
</pallas_src>

<mosaic_0001>
module attributes {stable_mosaic.version = 11 : i64} {
  func.func @_grid_cell_kernel(%arg0: i32, %arg1: memref<16x2xf32, #tpu.memory_space<vmem>>, %arg2: memref<2x192xf32, #tpu.memory_space<vmem>>, %arg3: memref<1x192xf32, #tpu.memory_space<vmem>>, %arg4: memref<16x192xf32, #tpu.memory_space<vmem>>) attributes {dimension_semantics = [#tpu.dimension_semantics<parallel>], iteration_bounds = array<i64: 1>, scalar_prefetch = 0 : i64, scratch_operands = 0 : i64, tpu.core_type = #tpu.core_type<tc>, window_params = [{transform_indices = @transform_0, window_bounds = array<i64: 16, 2>}, {pipeline_mode = #tpu.pipeline_mode<synchronous>, transform_indices = @transform_1, window_bounds = array<i64: 2, 192>}, {pipeline_mode = #tpu.pipeline_mode<synchronous>, transform_indices = @transform_2, window_bounds = array<i64: 1, 192>}, {transform_indices = @transform_3, window_bounds = array<i64: 16, 192>}]} {
    %c0 = arith.constant 0 : index
    %c0_0 = arith.constant 0 : index
    %0 = vector.load %arg1[%c0, %c0_0] : memref<16x2xf32, #tpu.memory_space<vmem>>, vector<16x1xf32>
    %c0_1 = arith.constant 0 : index
    %c1 = arith.constant 1 : index
    %1 = vector.load %arg1[%c0_1, %c1] : memref<16x2xf32, #tpu.memory_space<vmem>>, vector<16x1xf32>
    %c0_2 = arith.constant 0 : index
    %c0_3 = arith.constant 0 : index
    %2 = vector.load %arg2[%c0_2, %c0_3] : memref<2x192xf32, #tpu.memory_space<vmem>>, vector<1x192xf32>
    %c1_4 = arith.constant 1 : index
    %c0_5 = arith.constant 0 : index
    %3 = vector.load %arg2[%c1_4, %c0_5] : memref<2x192xf32, #tpu.memory_space<vmem>>, vector<1x192xf32>
    %4 = vector.broadcast %0 : vector<16x1xf32> to vector<16x192xf32>
    %5 = vector.broadcast %2 : vector<1x192xf32> to vector<16x192xf32>
    %6 = arith.mulf %4, %5 : vector<16x192xf32>
    %7 = vector.broadcast %1 : vector<16x1xf32> to vector<16x192xf32>
    %8 = vector.broadcast %3 : vector<1x192xf32> to vector<16x192xf32>
    %9 = arith.mulf %7, %8 : vector<16x192xf32>
    %10 = arith.addf %6, %9 : vector<16x192xf32>
    %c0_6 = arith.constant 0 : index
    %c0_7 = arith.constant 0 : index
    %11 = vector.load %arg3[%c0_6, %c0_7] : memref<1x192xf32, #tpu.memory_space<vmem>>, vector<1x192xf32>
    %12 = vector.broadcast %11 : vector<1x192xf32> to vector<16x192xf32>
    %13 = arith.addf %10, %12 : vector<16x192xf32>
    %cst = arith.constant 5.000000e-01 : f32
    %14 = vector.broadcast %cst : f32 to vector<16x192xf32>
    %15 = arith.mulf %13, %14 : vector<16x192xf32>
    %cst_8 = arith.constant 5.000000e-01 : f32
    %16 = vector.broadcast %cst_8 : f32 to vector<16x192xf32>
    %17 = arith.addf %15, %16 : vector<16x192xf32>
    %18 = math.floor %17 : vector<16x192xf32>
    %19 = arith.addf %18, %18 : vector<16x192xf32>
    %20 = arith.subf %13, %19 : vector<16x192xf32>
    %21 = arith.mulf %20, %20 : vector<16x192xf32>
    %cst_9 = arith.constant -2.19153535E-5 : f32
    %22 = vector.broadcast %cst_9 : f32 to vector<16x192xf32>
    %23 = arith.mulf %22, %21 : vector<16x192xf32>
    %cst_10 = arith.constant 4.66302794E-4 : f32
    %24 = vector.broadcast %cst_10 : f32 to vector<16x192xf32>
    %25 = arith.addf %23, %24 : vector<16x192xf32>
    %26 = arith.mulf %25, %21 : vector<16x192xf32>
    %cst_11 = arith.constant -0.00737043098 : f32
    %27 = vector.broadcast %cst_11 : f32 to vector<16x192xf32>
    %28 = arith.addf %26, %27 : vector<16x192xf32>
    %29 = arith.mulf %28, %21 : vector<16x192xf32>
    %cst_12 = arith.constant 0.0821458846 : f32
    %30 = vector.broadcast %cst_12 : f32 to vector<16x192xf32>
    %31 = arith.addf %29, %30 : vector<16x192xf32>
    %32 = arith.mulf %31, %21 : vector<16x192xf32>
    %cst_13 = arith.constant -0.599264503 : f32
    %33 = vector.broadcast %cst_13 : f32 to vector<16x192xf32>
    %34 = arith.addf %32, %33 : vector<16x192xf32>
    %35 = arith.mulf %34, %21 : vector<16x192xf32>
    %cst_14 = arith.constant 2.55016398 : f32
    %36 = vector.broadcast %cst_14 : f32 to vector<16x192xf32>
    %37 = arith.addf %35, %36 : vector<16x192xf32>
    %38 = arith.mulf %37, %21 : vector<16x192xf32>
    %cst_15 = arith.constant -5.16771269 : f32
    %39 = vector.broadcast %cst_15 : f32 to vector<16x192xf32>
    %40 = arith.addf %38, %39 : vector<16x192xf32>
    %41 = arith.mulf %21, %40 : vector<16x192xf32>
    %cst_16 = arith.constant 3.14159274 : f32
    %42 = vector.broadcast %cst_16 : f32 to vector<16x192xf32>
    %43 = arith.addf %42, %41 : vector<16x192xf32>
    %44 = arith.mulf %20, %43 : vector<16x192xf32>
    %c0_17 = arith.constant 0 : index
    %c0_18 = arith.constant 0 : index
    %45 = vector.load %arg4[%c0_17, %c0_18] : memref<16x192xf32, #tpu.memory_space<vmem>>, vector<16x192xf32>
    tpu.vector_store %arg4[%c0_17, %c0_18], %44 {strides = array<i32>} : memref<16x192xf32, #tpu.memory_space<vmem>>, vector<16x192xf32>,
    return
  }
  func.func @transform_0(%arg0: i32) -> (i32, i32) {
    %c0_i32 = arith.constant 0 : i32
    %c0_i32_0 = arith.constant 0 : i32
    return %arg0, %c0_i32 : i32, i32
  }
  func.func @transform_1(%arg0: i32) -> (i32, i32) {
    %c0_i32 = arith.constant 0 : i32
    %c0_i32_0 = arith.constant 0 : i32
    %c0_i32_1 = arith.constant 0 : i32
    return %c0_i32, %c0_i32_0 : i32, i32
  }
  func.func @transform_2(%arg0: i32) -> (i32, i32) {
    %c0_i32 = arith.constant 0 : i32
    %c0_i32_0 = arith.constant 0 : i32
    %c0_i32_1 = arith.constant 0 : i32
    return %c0_i32, %c0_i32_0 : i32, i32
  }
  func.func @transform_3(%arg0: i32) -> (i32, i32) {
    %c0_i32 = arith.constant 0 : i32
    %c0_i32_0 = arith.constant 0 : i32
    return %arg0, %c0_i32 : i32, i32
  }
}

</mosaic_0001>

<llo_original>
// kernel: theory_grid_cell_encode.1
$region0: #{theory_grid_cell_encode.1}
  #allocation0 [shape = 'u32[]', space=smem, size = 0x4, offset = 0x4, fixed_abs, tag = 'smem constant byte address 0x4 - core index']
  #allocation1 [shape = 'u32[144,128]{1,0:T(1,128)}', space=vmem, size = 0x12000, scoped, tag = 'internal scratch']
  %s0 = inlined_call_operand.vmem [shape: f32[16,2], index: 0, kind: input, shape index: {}]
  %s1 = inlined_call_operand.vmem [shape: f32[2,192], index: 1, kind: input, shape index: {}]
  %s2 = inlined_call_operand.vmem [shape: f32[1,192], index: 2, kind: input, shape index: {}]
  %s3 = inlined_call_operand.hbm [shape: f32[16,192], index: 3, kind: output, shape index: {}]
  %s4 = sld [smem:[#allocation0]]
  $region22: #{theory_grid_cell_encode.1} parent=0
    _
  %s6 = ssub.s32 1, %s4
  %s7 = scalar_select 0, %s6, %s4
  $region1: #{theory_grid_cell_encode.1} parent=0
    #allocation2 [shape = 'u8[16384]{0}', space=vmem, size = 0x4000, scoped, tag = 'output window, operand 0, single buffered']
    #allocation3 [shape = 's32[1]{0}', space=sflag, size = 0x4, scoped, tag = 'scoped memory for theory_grid_cell_encode.1']
    %8 = vsyncpa [#allocation3], 0
    // Predicated region
    $region2: #{theory_grid_cell_encode.1} parent=1 // pred_check
      _
    $region3: #{theory_grid_cell_encode.1} parent=1 // pred_check_branch
      %10 = sbr.rel (0) target = $region5
    $region4: #{theory_grid_cell_encode.1} parent=1 // pred_region
      _
    $region5: #{theory_grid_cell_encode.1} parent=1 // pred_fallthru
      _
    // Predicated region
    $region6: #{theory_grid_cell_encode.1} parent=1 // pred_check
      _
    $region7: #{theory_grid_cell_encode.1} parent=1 // pred_check_branch
      %12 = sbr.rel (0) target = $region9
    $region8: #{theory_grid_cell_encode.1} parent=1 // pred_region
      _
    $region9: #{theory_grid_cell_encode.1} parent=1 // pred_fallthru
      _
    // Predicated region
    $region10: #{theory_grid_cell_encode.1} parent=1 // pred_check
      _
    $region11: #{theory_grid_cell_encode.1} parent=1 // pred_check_branch
      %14 = sbr.rel (0) target = $region13
    $region12: #{theory_grid_cell_encode.1} parent=1 // pred_region
      _
    $region13: #{theory_grid_cell_encode.1} parent=1 // pred_fallthru
      _
    %v15 = vld [vmem:[%s0] sm:$0xff]
    %v16 = vld [vmem:[%s0 + $0x8] sm:$0xff]
    %v17 = vld [vmem:[%s1] ss:$2 sm:$0x3]
    %s18 = scalar_lea.vmem %s1, 1
    %v19 = vld [vmem:[%s18] ss:$2 sm:$0x3]
    %21 = vset.pattern.permute.xlu0 0
    %22 = vperm.xlu0 %21, %v15
    %v23 = vpop.permute.xlu0 %22
    %26 = vset.pattern.permute.xlu0 0
    %27 = vperm.xlu0 %26, %v16
    %v28 = vpop.permute.xlu0 %27
    %v31 = vlaneseq
    %v32 = vshrl.u32 %v31, 7
    %v33 = vsub.s32 0, %v32
    %v34 = vrot.slane %v17, %v33
    %v35 = vlaneseq
    %v36 = vshrl.u32 %v35, 7
    %v37 = vsub.s32 1, %v36
    %v38 = vrot.slane %v17, %v37
    %v41 = vmul.f32 %v23, %v34
    %v42 = vmul.f32 %v23, %v38
    %v43 = vmul.f32 %v28, %v34
    %v44 = vmul.f32 %v28, %v38
    %45 = vset.pattern.permute.xlu0 1
    %46 = vperm.xlu0 %45, %v15
    %v47 = vpop.permute.xlu0 %46
    %49 = vset.pattern.permute.xlu0 1
    %50 = vperm.xlu0 %49, %v16
    %v51 = vpop.permute.xlu0 %50
    %v54 = vlaneseq
    %v55 = vshrl.u32 %v54, 7
    %v56 = vsub.s32 0, %v55
    %v57 = vrot.slane %v19, %v56
    %v58 = vlaneseq
    %v59 = vshrl.u32 %v58, 7
    %v60 = vsub.s32 1, %v59
    %v61 = vrot.slane %v19, %v60
    %v64 = vmul.f32 %v47, %v57
    %v65 = vmul.f32 %v47, %v61
    %v66 = vmul.f32 %v51, %v57
    %v67 = vmul.f32 %v51, %v61
    %v68 = vadd.f32 %v41, %v64
    %v69 = vadd.f32 %v42, %v65
    %v70 = vadd.f32 %v43, %v66
    %v71 = vadd.f32 %v44, %v67
    %v72 = vld [vmem:[%s2] sm:$0x3]
    %v74 = vlaneseq
    %v75 = vshrl.u32 %v74, 7
    %v76 = vsub.s32 0, %v75
    %v77 = vrot.slane %v72, %v76
    %v78 = vlaneseq
    %v79 = vshrl.u32 %v78, 7
    %v80 = vsub.s32 1, %v79
    %v81 = vrot.slane %v72, %v80
    %v84 = vadd.f32 %v68, %v77
    %v85 = vadd.f32 %v69, %v81
    %v86 = vadd.f32 %v70, %v77
    %v87 = vadd.f32 %v71, %v81
    %v88 = vmul.f32 %v84, 0.5
    %v89 = vmul.f32 %v85, 0.5
    %v90 = vmul.f32 %v86, 0.5
    %v91 = vmul.f32 %v87, 0.5
    %v92 = vadd.f32 %v88, 0.5
    %v93 = vadd.f32 %v89, 0.5
    %v94 = vadd.f32 %v90, 0.5
    %v95 = vadd.f32 %v91, 0.5
    %v96 = vfloor.f32 %v92
    %v97 = vfloor.f32 %v93
    %v98 = vfloor.f32 %v94
    %v99 = vfloor.f32 %v95
    %v100 = vadd.f32 %v96, %v96
    %v101 = vadd.f32 %v97, %v97
    %v102 = vadd.f32 %v98, %v98
    %v103 = vadd.f32 %v99, %v99
    %v104 = vsub.f32 %v84, %v100
    %v105 = vsub.f32 %v85, %v101
    %v106 = vsub.f32 %v86, %v102
    %v107 = vsub.f32 %v87, %v103
    %v108 = vmul.f32 %v104, %v104
    %v109 = vmul.f32 %v105, %v105
    %v110 = vmul.f32 %v106, %v106
    %v111 = vmul.f32 %v107, %v107
    %v112 = vmul.f32 %v108, -2.1915353e-05
    %v113 = vmul.f32 %v109, -2.1915353e-05
    %v114 = vmul.f32 %v110, -2.1915353e-05
    %v115 = vmul.f32 %v111, -2.1915353e-05
    %v116 = vadd.f32 %v112, 0.0004663028
    %v117 = vadd.f32 %v113, 0.0004663028
    %v118 = vadd.f32 %v114, 0.0004663028
    %v119 = vadd.f32 %v115, 0.0004663028
    %v120 = vmul.f32 %v116, %v108
    %v121 = vmul.f32 %v117, %v109
    %v122 = vmul.f32 %v118, %v110
    %v123 = vmul.f32 %v119, %v111
    %v124 = vadd.f32 %v120, -0.007370431
    %v125 = vadd.f32 %v121, -0.007370431
    %v126 = vadd.f32 %v122, -0.007370431
    %v127 = vadd.f32 %v123, -0.007370431
    %v128 = vmul.f32 %v124, %v108
    %v129 = vmul.f32 %v125, %v109
    %v130 = vmul.f32 %v126, %v110
    %v131 = vmul.f32 %v127, %v111
    %v132 = vadd.f32 %v128, 0.082145885
    %v133 = vadd.f32 %v129, 0.082145885
    %v134 = vadd.f32 %v130, 0.082145885
    %v135 = vadd.f32 %v131, 0.082145885
    %v136 = vmul.f32 %v132, %v108
    %v137 = vmul.f32 %v133, %v109
    %v138 = vmul.f32 %v134, %v110
    %v139 = vmul.f32 %v135, %v111
    %v140 = vadd.f32 %v136, -0.5992645
    %v141 = vadd.f32 %v137, -0.5992645
    %v142 = vadd.f32 %v138, -0.5992645
    %v143 = vadd.f32 %v139, -0.5992645
    %v144 = vmul.f32 %v140, %v108
    %v145 = vmul.f32 %v141, %v109
    %v146 = vmul.f32 %v142, %v110
    %v147 = vmul.f32 %v143, %v111
    %v148 = vadd.f32 %v144, 2.550164
    %v149 = vadd.f32 %v145, 2.550164
    %v150 = vadd.f32 %v146, 2.550164
    %v151 = vadd.f32 %v147, 2.550164
    %v152 = vmul.f32 %v148, %v108
    %v153 = vmul.f32 %v149, %v109
    %v154 = vmul.f32 %v150, %v110
    %v155 = vmul.f32 %v151, %v111
    %v156 = vadd.f32 %v152, -5.1677127
    %v157 = vadd.f32 %v153, -5.1677127
    %v158 = vadd.f32 %v154, -5.1677127
    %v159 = vadd.f32 %v155, -5.1677127
    %v160 = vmul.f32 %v108, %v156
    %v161 = vmul.f32 %v109, %v157
    %v162 = vmul.f32 %v110, %v158
    %v163 = vmul.f32 %v111, %v159
    %v164 = vadd.f32 %v160, 3.1415927
    %v165 = vadd.f32 %v161, 3.1415927
    %v166 = vadd.f32 %v162, 3.1415927
    %v167 = vadd.f32 %v163, 3.1415927
    %v168 = vmul.f32 %v104, %v164
    %v169 = vmul.f32 %v105, %v165
    %v170 = vmul.f32 %v106, %v166
    %v171 = vmul.f32 %v107, %v167
    %172 = vst [vmem:[#allocation2] sm:$0xff] %v168
    %vm173 = vcmask 523264
    %174 = vst.msk [vmem:[#allocation2 + $0x8] sm:$0xff] %vm173, %v169
    %175 = vst [vmem:[#allocation2 + $0x10] sm:$0xff] %v170
    %176 = vst.msk [vmem:[#allocation2 + $0x18] sm:$0xff] %vm173, %v171
    // Predicated region
    $region14: #{theory_grid_cell_encode.1} parent=1 // pred_check
      _
    $region15: #{theory_grid_cell_encode.1} parent=1 // pred_check_branch
      %178 = sbr.rel (0) target = $region17
    $region16: #{theory_grid_cell_encode.1} parent=1 // pred_region
      %s180 = ssub.s32 512, 512
      %181 = vsyncadd [#allocation3], %s180
      %s182 = sshll.u32 [#allocation2], 4
      %s183 = int_to_ptr.vmem [resolvable:$true] %s182
      %188 = dma.vmem_to_hbm [thread:$0]  %s183, 512, %s3, [#allocation3], 256, 256, 16
    $region17: #{theory_grid_cell_encode.1} parent=1 // pred_fallthru
      _
    // Predicated region
    $region18: #{theory_grid_cell_encode.1} parent=1 // pred_check
      _
    $region19: #{theory_grid_cell_encode.1} parent=1 // pred_check_branch
      %190 = sbr.rel (0) target = $region21
    $region20: #{theory_grid_cell_encode.1} parent=1 // pred_region
      %191 = dma.done [#allocation3], 512
    $region21: #{theory_grid_cell_encode.1} parent=1 // pred_fallthru
      _
    %192 = vsyncpa [#allocation3], 1

</llo_original>
